<compile_context>
chip_gen: v7x
topology: tpu7x:2x2x1
jax: 0.10.0
libtpu: 0.0.40
codegen_flags: <defaults>
</compile_context>

<pallas_src>
import functools
import math

import jax
import jax.numpy as jnp
from jax.experimental import pallas as pl
from jax.experimental.pallas import tpu as pltpu


STORE_DTYPE = jnp.bfloat16     # storage / MXU-input dtype; accumulation is f32
MIB = 1024 * 1024


# ----------------------------------------------------------------------------
# Small helpers
# ----------------------------------------------------------------------------

def _bytes(shape, dtype):
    return math.prod(shape) * jnp.dtype(dtype).itemsize


def _vmem_limit(estimate_bytes):
    # Explicit scoped-VMEM limit: at least the 32 MiB default, at most v7x's
    # 64 MiB physical VMEM (safe on v5e/v6e which have 128 MiB).
    return int(min(64 * MIB, max(32 * MIB, estimate_bytes)))


def _seq_tile(s):
    # 128-row sequence tiles keep the per-step overhead amortised while bounding
    # (TQ, Sk) score / f32 temporaries; full extent for short sequences.
    return s if s < 128 else 128


def _inner_tile(i):
    # FFN inner-dim tile must divide I exactly (it is a contraction axis).
    for t in (512, 256, 128):
        if i % t == 0:
            return t
    return i


def _resident_kwargs():
    # Constant-index weights: single-buffer them (halves weight VMEM, no perf
    # cost since the block index never changes).
    if hasattr(pl, "Buffered"):
        return {"pipeline_mode": pl.Buffered(1)}
    return {}


def _wspec(shape):
    nd = len(shape)
    return pl.BlockSpec(shape, lambda *_: (0,) * nd, **_resident_kwargs())


def _add_layernorm(y_f32, gamma_ref, beta_ref):
    # torch nn.LayerNorm defaults: eps=1e-5, biased variance.
    mean = jnp.mean(y_f32, axis=-1, keepdims=True)
    var = jnp.mean((y_f32 - mean) ** 2, axis=-1, keepdims=True)
    normed = (y_f32 - mean) * jax.lax.rsqrt(var + 1e-5)
    return (normed * gamma_ref[...].astype(jnp.float32)
            + beta_ref[...].astype(jnp.float32))


# ----------------------------------------------------------------------------
# Pallas kernels
# ----------------------------------------------------------------------------

def _kv_proj_kernel(x_ref, wk_ref, wv_ref, k_ref, v_ref, *,
                    heads: int, key_size: int, value_size: int):
    """K = x @ Wk, V = x @ Wv for one (batch, seq-tile); head-major bf16 output.

    Runs once per (layer, attention) instead of once per q-tile; the fused-lane
    -> head-major split happens here, amortised over all downstream q tiles.
    """
    x = x_ref[0]                                                     # (T, D) bf16
    kf = jnp.dot(x, wk_ref[...], preferred_element_type=jnp.float32)  # (T, H*Kd)
    vf = jnp.dot(x, wv_ref[...], preferred_element_type=jnp.float32)  # (T, H*Vd)
    for h in range(heads):
        k_ref[0, h] = kf[:, h * key_size:(h + 1) * key_size].astype(k_ref.dtype)
        v_ref[0, h] = vf[:, h * value_size:(h + 1) * value_size].astype(v_ref.dtype)


def _mha_addnorm_kernel(x_ref, k_ref, v_ref, wq_ref, wo_ref, bo_ref,
                        gamma_ref, beta_ref, o_ref, *,
                        heads: int, key_size: int, causal: bool, q_tile: int):
    """Attention (precomputed head-major K/V) + residual + LayerNorm.

    x_ref : (1, TQ, D)           query-side input (also the residual)
    k_ref : (1, H, Sk, Kd) bf16  v_ref : (1, H, Sk, Vd) bf16
    wq_ref: (H, D, Kd)           head-major -> no lane slicing of a fused Q
    wo_ref: (H*Vd, D)            bo/gamma/beta : (1, D)
    """
    x = x_ref[0]                                                     # (TQ, D) bf16
    tq = x.shape[0]
    sk = k_ref.shape[2]
    scale = jnp.float32(1.0 / math.sqrt(key_size))

    if causal:
        # Finite large-negative bias (no NaN if a row were ever fully masked).
        q_off = pl.program_id(1) * q_tile
        row = jax.lax.broadcasted_iota(jnp.int32, (tq, sk), 0) + q_off
        col = jax.lax.broadcasted_iota(jnp.int32, (tq, sk), 1)
        mask_bias = jnp.where(col <= row, jnp.float32(0.0), jnp.float32(-1e30))

    ctx_heads = []
    for h in range(heads):
        # Per-head Q projection; scale once on (TQ, Kd) then feed bf16 to the MXU.
        qh = jnp.dot(x, wq_ref[h], preferred_element_type=jnp.float32) * scale
        qh = qh.astype(STORE_DTYPE)                                  # (TQ, Kd) bf16
        kh = k_ref[0, h]                                             # (Sk, Kd) bf16
        vh = v_ref[0, h]                                             # (Sk, Vd) bf16

        # scores = qh @ kh^T  (bf16 x bf16 -> f32, no explicit transpose).
        s = jax.lax.dot_general(qh, kh, (((1,), (1,)), ((), ())),
                                preferred_element_type=jnp.float32)  # (TQ, Sk)
        if causal:
            s = s + mask_bias

        m = jnp.max(s, axis=-1, keepdims=True)
        e = jnp.exp(s - m)
        p = e * pl.reciprocal(jnp.sum(e, axis=-1, keepdims=True), approx=True)

        ctx_heads.append(jnp.dot(p.astype(STORE_DTYPE), vh,
                                 preferred_element_type=jnp.float32
                                 ).astype(STORE_DTYPE))              # (TQ, Vd)

    # Single fused output projection over all heads: K = H*Vd (full MXU depth)
    # instead of H small per-head matmuls.
    ctx = jnp.concatenate(ctx_heads, axis=-1)                        # (TQ, H*Vd)
    attn = jnp.dot(ctx, wo_ref[...], preferred_element_type=jnp.float32)
    attn = attn + bo_ref[...].astype(jnp.float32)

    y = attn + x.astype(jnp.float32)                                 # residual
    o_ref[0] = _add_layernorm(y, gamma_ref, beta_ref).astype(o_ref.dtype)


def _ffn_addnorm_kernel(x_ref, w1_ref, b1_ref, w2_ref, b2_ref,
                        gamma_ref, beta_ref, o_ref, acc_ref):
    """LayerNorm(relu(x@W1+b1)@W2 + b2 + x), inner dim K-tiled on grid axis 2."""
    it = pl.program_id(2)

    @pl.when(it == 0)
    def _():
        acc_ref[...] = jnp.zeros_like(acc_ref)

    x = x_ref[0]                                                     # (TQ, D) bf16
    h = jnp.dot(x, w1_ref[...], preferred_element_type=jnp.float32)  # (TQ, tI)
    h = jnp.maximum(h + b1_ref[...].astype(jnp.float32), 0.0)
    acc_ref[...] += jnp.dot(h.astype(STORE_DTYPE), w2_ref[...],
                            preferred_element_type=jnp.float32)      # (TQ, D)

    @pl.when(it == pl.num_programs(2) - 1)
    def _():
        f = acc_ref[...] + b2_ref[...].astype(jnp.float32)
        y = f + x.astype(jnp.float32)                                # residual
        o_ref[0] = _add_layernorm(y, gamma_ref, beta_ref).astype(o_ref.dtype)


def _predictor_kernel(x_ref, embt_ref, o_ref, *, output_logits: bool):
    """logits = x @ E^T (E^T pre-transposed to (D, V)); softmax unless logits."""
    logits = jnp.dot(x_ref[0], embt_ref[...], preferred_element_type=jnp.float32)
    if output_logits:
        o_ref[0] = logits
    else:
        m = jnp.max(logits, axis=-1, keepdims=True)
        e = jnp.exp(logits - m)
        o_ref[0] = e / jnp.sum(e, axis=-1, keepdims=True)   # exact normalisation


# ----------------------------------------------------------------------------
# Pallas wrappers
# ----------------------------------------------------------------------------

def kv_proj_pallas(kv, mha_p):
    """Project K/V once per (layer, attention): (B,H,Sk,Kd) / (B,H,Sk,Vd) bf16."""
    B, Sk, D = kv.shape
    heads = mha_p["heads"]
    HKd = mha_p["wk"].shape[1]
    HVd = mha_p["wv"].shape[1]
    kd = HKd // heads
    vd = HVd // heads
    ts = _seq_tile(Sk)
    kernel = functools.partial(_kv_proj_kernel, heads=heads,
                               key_size=kd, value_size=vd)
    est = (2 * _bytes((1, ts, D), STORE_DTYPE)
           + _bytes((D, HKd), STORE_DTYPE) + _bytes((D, HVd), STORE_DTYPE)
           + 2 * (_bytes((1, heads, ts, kd), STORE_DTYPE)
                  + _bytes((1, heads, ts, vd), STORE_DTYPE))
           + 4 * _bytes((ts, HKd), jnp.float32) + 4 * MIB)
    return pl.pallas_call(
        kernel,
        out_shape=(jax.ShapeDtypeStruct((B, heads, Sk, kd), STORE_DTYPE),
                   jax.ShapeDtypeStruct((B, heads, Sk, vd), STORE_DTYPE)),
        grid=(B, pl.cdiv(Sk, ts)),
        in_specs=[
            pl.BlockSpec((1, ts, D), lambda b, si: (b, si, 0)),
            _wspec((D, HKd)),
            _wspec((D, HVd)),
        ],
        out_specs=(pl.BlockSpec((1, heads, ts, kd), lambda b, si: (b, 0, si, 0)),
                   pl.BlockSpec((1, heads, ts, vd), lambda b, si: (b, 0, si, 0))),
        compiler_params=pltpu.CompilerParams(
            dimension_semantics=("parallel", "parallel"),
            vmem_limit_bytes=_vmem_limit(est)),
    )(kv, mha_p["wk"], mha_p["wv"])


def mha_addnorm_pallas(x, k, v, mha_p, norm_p, *, causal):
    B, Sq, D = x.shape
    heads, _, kd = mha_p["wq"].shape
    Sk = k.shape[2]
    vd = v.shape[-1]
    HVd = heads * vd
    tq = _seq_tile(Sq)
    kernel = functools.partial(_mha_addnorm_kernel, heads=heads, key_size=kd,
                               causal=causal, q_tile=tq)
    est = (4 * _bytes((1, tq, D), STORE_DTYPE)
           + 2 * (_bytes((1, heads, Sk, kd), STORE_DTYPE)
                  + _bytes((1, heads, Sk, vd), STORE_DTYPE))
           + _bytes(mha_p["wq"].shape, STORE_DTYPE) + _bytes((HVd, D), STORE_DTYPE)
           + 4 * _bytes((tq, Sk), jnp.float32) + 4 * MIB)
    # TODO(synk): flash-style KV-tile grid axis with online-softmax scratch for
    #             multi-K Sk on v7x; at these shapes full-Sk K/V fit VMEM.
    return pl.pallas_call(
        kernel,
        out_shape=jax.ShapeDtypeStruct((B, Sq, D), x.dtype),
        grid=(B, pl.cdiv(Sq, tq)),
        in_specs=[
            pl.BlockSpec((1, tq, D), lambda b, qi: (b, qi, 0)),
            pl.BlockSpec((1, heads, Sk, kd), lambda b, qi: (b, 0, 0, 0)),
            pl.BlockSpec((1, heads, Sk, vd), lambda b, qi: (b, 0, 0, 0)),
            _wspec((heads, D, kd)),
            _wspec((HVd, D)),
            _wspec((1, D)),
            _wspec((1, D)),
            _wspec((1, D)),
        ],
        out_specs=pl.BlockSpec((1, tq, D), lambda b, qi: (b, qi, 0)),
        compiler_params=pltpu.CompilerParams(
            dimension_semantics=("parallel", "parallel"),
            vmem_limit_bytes=_vmem_limit(est)),
    )(x, k, v, mha_p["wq"], mha_p["wo"], mha_p["bo"],
      norm_p["gamma"], norm_p["beta"])


def ffn_addnorm_pallas(x, ff_p, norm_p):
    B, S, D = x.shape
    I = ff_p["w1"].shape[1]
    tq = _seq_tile(S)
    ti = _inner_tile(I)
    est = (4 * _bytes((1, tq, D), STORE_DTYPE)
           + 2 * (_bytes((D, ti), STORE_DTYPE) + _bytes((ti, D), STORE_DTYPE)
                  + _bytes((1, ti), STORE_DTYPE))
           + 2 * _bytes((tq, ti), jnp.float32) + _bytes((tq, D), jnp.float32)
           + 4 * MIB)
    return pl.pallas_call(
        _ffn_addnorm_kernel,
        out_shape=jax.ShapeDtypeStruct((B, S, D), x.dtype),
        grid=(B, pl.cdiv(S, tq), I // ti),
        in_specs=[
            pl.BlockSpec((1, tq, D), lambda b, qi, ii: (b, qi, 0)),
            pl.BlockSpec((D, ti), lambda b, qi, ii: (0, ii)),
            pl.BlockSpec((1, ti), lambda b, qi, ii: (0, ii)),
            pl.BlockSpec((ti, D), lambda b, qi, ii: (ii, 0)),
            _wspec((1, D)),
            _wspec((1, D)),
            _wspec((1, D)),
        ],
        out_specs=pl.BlockSpec((1, tq, D), lambda b, qi, ii: (b, qi, 0)),
        scratch_shapes=[pltpu.VMEM((tq, D), jnp.float32)],
        compiler_params=pltpu.CompilerParams(
            dimension_semantics=("parallel", "parallel", "arbitrary"),
            vmem_limit_bytes=_vmem_limit(est)),
    )(x, ff_p["w1"], ff_p["b1"], ff_p["w2"], ff_p["b2"],
      norm_p["gamma"], norm_p["beta"])


def predictor_pallas(x, emb_t, *, output_logits):
    B, S, D = x.shape
    V = emb_t.shape[1]
    tq = _seq_tile(S)
    kernel = functools.partial(_predictor_kernel, output_logits=output_logits)
    est = (2 * _bytes((1, tq, D), STORE_DTYPE) + _bytes((D, V), STORE_DTYPE)
           + 2 * _bytes((1, tq, V), jnp.float32)
           + 2 * _bytes((tq, V), jnp.float32) + 4 * MIB)
    # TODO(synk): tile the vocabulary axis (grid axis over V + two-pass/online
    #             softmax, padded lane-dense output) for 32K+ vocabularies.
    return pl.pallas_call(
        kernel,
        out_shape=jax.ShapeDtypeStruct((B, S, V), jnp.float32),
        grid=(B, pl.cdiv(S, tq)),
        in_specs=[
            pl.BlockSpec((1, tq, D), lambda b, qi: (b, qi, 0)),
            _wspec((D, V)),
        ],
        out_specs=pl.BlockSpec((1, tq, V), lambda b, qi: (b, qi, 0)),
        compiler_params=pltpu.CompilerParams(
            dimension_semantics=("parallel", "parallel"),
            vmem_limit_bytes=_vmem_limit(est)),
    )(x, emb_t)


# ----------------------------------------------------------------------------
# Plain-JAX glue: positional embedding, embedding lookup, parameter init
# ----------------------------------------------------------------------------

def create_positional_embedding(seq_len, model_size):
    pos = jnp.arange(seq_len, dtype=jnp.float32)[:, None]
    dim = jnp.arange(model_size, dtype=jnp.float32)[None, :]
    angle = pos / (10000.0 ** (2.0 * dim / model_size))
    odd_mask = (jnp.arange(model_size) % 2 == 1)[None, :]
    return jnp.where(odd_mask, jnp.cos(angle), jnp.sin(angle))


def init_params(key, *, block_count, heads, model_size, key_size, value_size,
                inner_size, dictionary_size, dtype=STORE_DTYPE):
    state = {"key": key}

    def nrm(shape, scale=0.1):
        state["key"], sub = jax.random.split(state["key"])
        return (scale * jax.random.normal(sub, shape, jnp.float32)).astype(dtype)

    def mha_params():
        return dict(
            heads=heads,
            wq=nrm((heads, model_size, key_size)),      # head-major Q weights
            wk=nrm((model_size, heads * key_size)),     # lane-fused K projection
            wv=nrm((model_size, heads * value_size)),   # lane-fused V projection
            wo=nrm((heads * value_size, model_size)),
            bo=nrm((1, model_size)),
        )

    def norm_params():
        return dict(gamma=jnp.ones((1, model_size), dtype),
                    beta=jnp.zeros((1, model_size), dtype))

    def ffn_params():
        return dict(
            w1=nrm((model_size, inner_size)),
            b1=nrm((1, inner_size)),
            w2=nrm((inner_size, model_size)),
            b2=nrm((1, model_size)),
        )

    encoder_blocks = [dict(mha=mha_params(), norm1=norm_params(),
                           ff=ffn_params(), norm2=norm_params())
                      for _ in range(block_count)]
    decoder_blocks = [dict(mmha=mha_params(), norm1=norm_params(),
                           mha=mha_params(), norm2=norm_params(),
                           ff=ffn_params(), norm3=norm_params())
                      for _ in range(block_count)]

    # Embedding init mirrors the torch module: uniform, de-meaned, unit-std,
    # scaled by sqrt(1/model_size).
    state["key"], sub = jax.random.split(state["key"])
    emb = jax.random.uniform(sub, (dictionary_size, model_size), jnp.float32)
    emb = emb - jnp.mean(emb)
    emb = emb / jnp.std(emb)
    emb = emb * math.sqrt(1.0 / model_size)
    emb = emb.astype(dtype)

    return dict(encoder_blocks=encoder_blocks, decoder_blocks=decoder_blocks,
                embeddings=emb,
                embeddings_t=jnp.asarray(emb.T),   # (D, V) for the predictor
                model_size=model_size)


# ----------------------------------------------------------------------------
# Full Transformer forward
# ----------------------------------------------------------------------------

def transformer_forward(params, input_tokens, output_tokens, output_logits=False):
    D = params["model_size"]
    emb = params["embeddings"]
    act_dtype = emb.dtype

    # TODO(synk): embedding gather stays as plain-JAX glue (dynamic-gather has
    #             no clean simple Pallas equivalent at these shapes).
    in_seq = input_tokens.shape[-1]
    x = (emb[input_tokens].astype(jnp.float32) * math.sqrt(D)
         + create_positional_embedding(in_seq, D)).astype(act_dtype)

    for blk in params["encoder_blocks"]:
        k, v = kv_proj_pallas(x, blk["mha"])
        x = mha_addnorm_pallas(x, k, v, blk["mha"], blk["norm1"], causal=False)
        x = ffn_addnorm_pallas(x, blk["ff"], blk["norm2"])
    encoder_out = x

    out_seq = output_tokens.shape[-1]
    y = (emb[output_tokens].astype(jnp.float32) * math.sqrt(D)
         + create_positional_embedding(out_seq, D)).astype(act_dtype)

    for blk in params["decoder_blocks"]:
        k1, v1 = kv_proj_pallas(y, blk["mmha"])                    # self-attn K/V
        y = mha_addnorm_pallas(y, k1, v1, blk["mmha"], blk["norm1"], causal=True)
        k2, v2 = kv_proj_pallas(encoder_out, blk["mha"])           # cross-attn K/V
        y = mha_addnorm_pallas(y, k2, v2, blk["mha"], blk["norm2"], causal=False)
        y = ffn_addnorm_pallas(y, blk["ff"], blk["norm3"])

    return predictor_pallas(y, params["embeddings_t"], output_logits=output_logits)


# ----------------------------------------------------------------------------
# Demo
# ----------------------------------------------------------------------------

if __name__ == "__main__":
    BLOCK_COUNT = 2
    HEADS = 2
    MODEL_SIZE = 32
    KEY_SIZE = 16
    VALUE_SIZE = 16
    INNER_SIZE = 64
    DICT_SIZE = 64
    BATCH = 2
    IN_SEQ = 8
    OUT_SEQ = 8

    root = jax.random.PRNGKey(0)
    k_param, k_in, k_out = jax.random.split(root, 3)

    params = init_params(
        k_param, block_count=BLOCK_COUNT, heads=HEADS, model_size=MODEL_SIZE,
        key_size=KEY_SIZE, value_size=VALUE_SIZE, inner_size=INNER_SIZE,
        dictionary_size=DICT_SIZE)

    input_tokens = jax.random.randint(k_in, (BATCH, IN_SEQ), 0, DICT_SIZE,
                                      dtype=jnp.int32)
    output_tokens = jax.random.randint(k_out, (BATCH, OUT_SEQ), 0, DICT_SIZE,
                                       dtype=jnp.int32)

    probs = transformer_forward(params, input_tokens, output_tokens,
                                output_logits=False)
    probs = jax.block_until_ready(probs)

    assert probs.shape == (BATCH, OUT_SEQ, DICT_SIZE)
    assert bool(jnp.all(jnp.isfinite(probs)))
    assert bool(jnp.allclose(jnp.sum(probs, axis=-1), 1.0, atol=1e-3))

    print("KERNEL_OK")
</pallas_src>

<mosaic_0001>
module attributes {stable_mosaic.version = 11 : i64} {
  func.func @_kv_proj_kernel(%arg0: i32, %arg1: i32, %arg2: memref<1x8x32xbf16, #tpu.memory_space<vmem>>, %arg3: memref<32x32xbf16, #tpu.memory_space<vmem>>, %arg4: memref<32x32xbf16, #tpu.memory_space<vmem>>, %arg5: memref<1x2x8x16xbf16, #tpu.memory_space<vmem>>, %arg6: memref<1x2x8x16xbf16, #tpu.memory_space<vmem>>) attributes {dimension_semantics = [#tpu.dimension_semantics<parallel>, #tpu.dimension_semantics<parallel>], iteration_bounds = array<i64: 2, 1>, scalar_prefetch = 0 : i64, scratch_operands = 0 : i64, tpu.core_type = #tpu.core_type<tc>, window_params = [{transform_indices = @transform_0, window_bounds = array<i64: 1, 8, 32>}, {pipeline_mode = #tpu.pipeline_mode<synchronous>, transform_indices = @transform_1, window_bounds = array<i64: 32, 32>}, {pipeline_mode = #tpu.pipeline_mode<synchronous>, transform_indices = @transform_2, window_bounds = array<i64: 32, 32>}, {transform_indices = @transform_3, window_bounds = array<i64: 1, 2, 8, 16>}, {transform_indices = @transform_4, window_bounds = array<i64: 1, 2, 8, 16>}]} {
    %c0 = arith.constant 0 : index
    %c0_0 = arith.constant 0 : index
    %c0_1 = arith.constant 0 : index
    %0 = vector.load %arg2[%c0, %c0_0, %c0_1] : memref<1x8x32xbf16, #tpu.memory_space<vmem>>, vector<1x8x32xbf16>
    %1 = vector.shape_cast %0 : vector<1x8x32xbf16> to vector<8x32xbf16>
    %c0_2 = arith.constant 0 : index
    %c0_3 = arith.constant 0 : index
    %2 = vector.load %arg3[%c0_2, %c0_3] : memref<32x32xbf16, #tpu.memory_space<vmem>>, vector<32x32xbf16>
    %cst = arith.constant dense<0.000000e+00> : vector<8x32xf32>
    %3 = tpu.matmul %1, %2, %cst {dimension_numbers = #tpu.dot_dimension_numbers<[1], [0], [0], [1], [0, 0, 1, 1], [], []>} : vector<8x32xbf16>, vector<32x32xbf16>, vector<8x32xf32> -> vector<8x32xf32>
    %c0_4 = arith.constant 0 : index
    %c0_5 = arith.constant 0 : index
    %4 = vector.load %arg4[%c0_4, %c0_5] : memref<32x32xbf16, #tpu.memory_space<vmem>>, vector<32x32xbf16>
    %cst_6 = arith.constant dense<0.000000e+00> : vector<8x32xf32>
    %5 = tpu.matmul %1, %4, %cst_6 {dimension_numbers = #tpu.dot_dimension_numbers<[1], [0], [0], [1], [0, 0, 1, 1], [], []>} : vector<8x32xbf16>, vector<32x32xbf16>, vector<8x32xf32> -> vector<8x32xf32>
    %6 = vector.extract_strided_slice %3 {offsets = [0, 0], sizes = [8, 16], strides = [1, 1]} : vector<8x32xf32> to vector<8x16xf32>
    %7 = arith.truncf %6 : vector<8x16xf32> to vector<8x16xbf16>
    %c0_7 = arith.constant 0 : index
    %c0_8 = arith.constant 0 : index
    %c0_9 = arith.constant 0 : index
    %c0_10 = arith.constant 0 : index
    %8 = vector.load %arg5[%c0_7, %c0_8, %c0_9, %c0_10] : memref<1x2x8x16xbf16, #tpu.memory_space<vmem>>, vector<1x1x8x16xbf16>
    %9 = vector.shape_cast %8 : vector<1x1x8x16xbf16> to vector<8x16xbf16>
    %10 = vector.shape_cast %7 : vector<8x16xbf16> to vector<1x1x8x16xbf16>
    tpu.vector_store %arg5[%c0_7, %c0_8, %c0_9, %c0_10], %10 {strides = array<i32>} : memref<1x2x8x16xbf16, #tpu.memory_space<vmem>>, vector<1x1x8x16xbf16>,
    %11 = vector.extract_strided_slice %5 {offsets = [0, 0], sizes = [8, 16], strides = [1, 1]} : vector<8x32xf32> to vector<8x16xf32>
    %12 = arith.truncf %11 : vector<8x16xf32> to vector<8x16xbf16>
    %c0_11 = arith.constant 0 : index
    %c0_12 = arith.constant 0 : index
    %c0_13 = arith.constant 0 : index
    %c0_14 = arith.constant 0 : index
    %13 = vector.load %arg6[%c0_11, %c0_12, %c0_13, %c0_14] : memref<1x2x8x16xbf16, #tpu.memory_space<vmem>>, vector<1x1x8x16xbf16>
    %14 = vector.shape_cast %13 : vector<1x1x8x16xbf16> to vector<8x16xbf16>
    %15 = vector.shape_cast %12 : vector<8x16xbf16> to vector<1x1x8x16xbf16>
    tpu.vector_store %arg6[%c0_11, %c0_12, %c0_13, %c0_14], %15 {strides = array<i32>} : memref<1x2x8x16xbf16, #tpu.memory_space<vmem>>, vector<1x1x8x16xbf16>,
    %16 = vector.extract_strided_slice %3 {offsets = [0, 16], sizes = [8, 16], strides = [1, 1]} : vector<8x32xf32> to vector<8x16xf32>
    %17 = arith.truncf %16 : vector<8x16xf32> to vector<8x16xbf16>
    %c0_15 = arith.constant 0 : index
    %c1 = arith.constant 1 : index
    %c0_16 = arith.constant 0 : index
    %c0_17 = arith.constant 0 : index
    %18 = vector.load %arg5[%c0_15, %c1, %c0_16, %c0_17] : memref<1x2x8x16xbf16, #tpu.memory_space<vmem>>, vector<1x1x8x16xbf16>
    %19 = vector.shape_cast %18 : vector<1x1x8x16xbf16> to vector<8x16xbf16>
    %20 = vector.shape_cast %17 : vector<8x16xbf16> to vector<1x1x8x16xbf16>
    tpu.vector_store %arg5[%c0_15, %c1, %c0_16, %c0_17], %20 {strides = array<i32>} : memref<1x2x8x16xbf16, #tpu.memory_space<vmem>>, vector<1x1x8x16xbf16>,
    %21 = vector.extract_strided_slice %5 {offsets = [0, 16], sizes = [8, 16], strides = [1, 1]} : vector<8x32xf32> to vector<8x16xf32>
    %22 = arith.truncf %21 : vector<8x16xf32> to vector<8x16xbf16>
    %c0_18 = arith.constant 0 : index
    %c1_19 = arith.constant 1 : index
    %c0_20 = arith.constant 0 : index
    %c0_21 = arith.constant 0 : index
    %23 = vector.load %arg6[%c0_18, %c1_19, %c0_20, %c0_21] : memref<1x2x8x16xbf16, #tpu.memory_space<vmem>>, vector<1x1x8x16xbf16>
    %24 = vector.shape_cast %23 : vector<1x1x8x16xbf16> to vector<8x16xbf16>
    %25 = vector.shape_cast %22 : vector<8x16xbf16> to vector<1x1x8x16xbf16>
    tpu.vector_store %arg6[%c0_18, %c1_19, %c0_20, %c0_21], %25 {strides = array<i32>} : memref<1x2x8x16xbf16, #tpu.memory_space<vmem>>, vector<1x1x8x16xbf16>,
    return
  }
  func.func @transform_0(%arg0: i32, %arg1: i32) -> (i32, i32, i32) {
    %c0_i32 = arith.constant 0 : i32
    %c0_i32_0 = arith.constant 0 : i32
    return %arg0, %arg1, %c0_i32 : i32, i32, i32
  }
  func.func @transform_1(%arg0: i32, %arg1: i32) -> (i32, i32) {
    %c0_i32 = arith.constant 0 : i32
    %c0_i32_0 = arith.constant 0 : i32
    %c0_i32_1 = arith.constant 0 : i32
    return %c0_i32, %c0_i32_0 : i32, i32
  }
  func.func @transform_2(%arg0: i32, %arg1: i32) -> (i32, i32) {
    %c0_i32 = arith.constant 0 : i32
    %c0_i32_0 = arith.constant 0 : i32
    %c0_i32_1 = arith.constant 0 : i32
    return %c0_i32, %c0_i32_0 : i32, i32
  }
  func.func @transform_3(%arg0: i32, %arg1: i32) -> (i32, i32, i32, i32) {
    %c0_i32 = arith.constant 0 : i32
    %c0_i32_0 = arith.constant 0 : i32
    %c0_i32_1 = arith.constant 0 : i32
    return %arg0, %c0_i32, %arg1, %c0_i32_0 : i32, i32, i32, i32
  }
  func.func @transform_4(%arg0: i32, %arg1: i32) -> (i32, i32, i32, i32) {
    %c0_i32 = arith.constant 0 : i32
    %c0_i32_0 = arith.constant 0 : i32
    %c0_i32_1 = arith.constant 0 : i32
    return %arg0, %c0_i32, %arg1, %c0_i32_0 : i32, i32, i32, i32
  }
}

</mosaic_0001>

<llo_original>
// kernel: tpu_custom_call.1
$region0: #{tpu_custom_call.1}
  #allocation0 [shape = 'u32[]', space=smem, size = 0x4, offset = 0x4, fixed_abs, tag = 'smem constant byte address 0x4 - core index']
  #allocation1 [shape = 'u32[144,128]{1,0:T(1,128)}', space=vmem, size = 0x12000, scoped, tag = 'internal scratch']
  %s0 = inlined_call_operand.hbm [shape: bf16[2,8,32], index: 0, kind: input, shape index: {}]
  %s1 = inlined_call_operand.hbm [shape: bf16[32,32], index: 1, kind: input, shape index: {}]
  %s2 = inlined_call_operand.hbm [shape: bf16[32,32], index: 2, kind: input, shape index: {}]
  %s3 = inlined_call_operand.hbm [shape: bf16[2,2,8,16], index: 3, kind: output, shape index: {0}]
  %s4 = inlined_call_operand.hbm [shape: bf16[2,2,8,16], index: 4, kind: output, shape index: {1}]
  %5 = xla_tuple %s3, %s4
  %s6 = sld [smem:[#allocation0]]
  $region65: #{tpu_custom_call.1} parent=0
    _
  %s8 = ssub.s32 1, %s6
  %s9 = scalar_select 0, %s8, %s6
  $region1: #{tpu_custom_call.1} parent=0
    #allocation2 [shape = 'u8[4096]{0}', space=vmem, size = 0x1000, scoped, tag = 'input window, operand 0']
    #allocation3 [shape = 's32[2]{0}', space=sflag, size = 0x8, scoped, tag = 'scoped memory for tpu_custom_call.1']
    #allocation4 [shape = 's32[2]{0}', space=sflag, size = 0x8, scoped, tag = 'scoped memory for tpu_custom_call.1']
    #allocation5 [shape = 'u8[8192]{0}', space=vmem, size = 0x2000, scoped, tag = 'input window, operand 1, single buffered']
    #allocation6 [shape = 's32[1]{0}', space=sflag, size = 0x4, scoped, tag = 'scoped memory for tpu_custom_call.1']
    #allocation7 [shape = 'u8[8192]{0}', space=vmem, size = 0x2000, scoped, tag = 'input window, operand 2, single buffered']
    #allocation8 [shape = 'u8[8192]{0}', space=vmem, size = 0x2000, scoped, tag = 'output window, operand 0']
    #allocation9 [shape = 'u8[8192]{0}', space=vmem, size = 0x2000, scoped, tag = 'output window, operand 1']
    #allocation10 [shape = 's32[2]{0}', space=sflag, size = 0x8, scoped, tag = 'scoped memory for tpu_custom_call.1']
    %10 = vsyncpa [#allocation3], 0
    %s11 = scalar_lea.sflag [#allocation3], 1
    %12 = vsyncpa %s11, 0
    %13 = vsyncpa [#allocation6], 0
    %14 = vsyncpa [#allocation4], 0
    %s15 = scalar_lea.sflag [#allocation4], 1
    %16 = vsyncpa %s15, 0
    %17 = vsyncpa [#allocation10], 0
    %s18 = scalar_lea.sflag [#allocation10], 1
    %19 = vsyncpa %s18, 0
    loop: start=0, step=1, limit=4
    $region2: #{tpu_custom_call.1} parent=1 // loop_pre_header
      _
    $region3: #{tpu_custom_call.1} parent=1 // loop_header
      %s21 = sphi 0, %s25
      %p22 = scmp.ge.s32.totalorder %s21, 4
      %s28 = sphi 0, %s40
      %s29 = sphi 0, %s36
      %s30 = sphi 0, %s28
      %s31 = sphi 0, %s29
      %s32 = sphi 0, %s30
      %s33 = sphi 0, %s31
      %s45 = sphi 0, %s47
      %s48 = sphi 0, %s45
      %s49 = sphi 0, %s48
      %s65 = sphi 0, %s49
      %s69 = sphi 0, %s69
      %s71 = sphi 0, %s69
      %s72 = sphi 0, %s71
      %s86 = sphi 0, %s72
      %s90 = sphi 0, %s90
      %s92 = sphi 0, %s90
      %s93 = sphi 0, %s92
      %s107 = sphi 0, %s93
      %s115 = sphi 0, %s117
      %s118 = sphi 0, %s115
      %s119 = sphi 0, %s118
      %s135 = sphi 0, %s119
      %s143 = sphi 0, %s145
      %s146 = sphi 0, %s143
      %s147 = sphi 0, %s146
      %s163 = sphi 0, %s147
    $region4: #{tpu_custom_call.1} parent=1 // loop_header_branch
      %24 = sbr.rel (%p22) target = $region8
    $region5: #{tpu_custom_call.1} parent=1 // loop_body
      %s26 = ssub.s32 %s21, 1
      %s27 = ssub.s32 %s21, 2
      %s34 = sadd.s32 1, %s29
      %p35 = scmp.ge.s32.totalorder %s34, 1
      %s36 = scalar_select %p35, 0, %s34
      %s37 = sadd.s32 1, %s28
      %s38 = scalar_select %p35, %s37, %s28
      %p39 = scmp.ge.s32.totalorder %s38, 2
      %s40 = scalar_select %p39, 0, %s38
      %s41 = ssub.s32 %s28, %s40
      %s42 = ssub.s32 %s29, %s36
      %s43 = sor.u32 %s41, %s42
      %p44 = scmp.eq.s32.totalorder %s43, 0
      %s46 = sadd.s32 %s45, 1
      %s47 = scalar_select %p44, %s45, %s46
      %p50 = pneg %p44
      %p51 = scmp.eq.s32.totalorder %s21, 1
      %p52 = por %p50, %p51
      %p53 = scmp.ne.s32.totalorder %s45, %s48
      %p54 = scmp.eq.s32.totalorder %s21, 0
      %p55 = por %p53, %p54
      %p56 = scmp.ne.s32.totalorder %s45, %s48
      %p57 = scmp.eq.s32.totalorder %s26, 1
      %p58 = por %p56, %p57
      %p59 = scmp.ne.s32.totalorder %s48, %s49
      %p60 = scmp.eq.s32.totalorder %s26, 0
      %p61 = por %p59, %p60
      %p62 = scmp.ne.s32.totalorder %s48, %s49
      %p63 = scmp.eq.s32.totalorder %s27, 1
      %p64 = por %p62, %p63
      %p66 = scmp.ne.s32.totalorder %s49, %s65
      %p67 = scmp.eq.s32.totalorder %s27, 0
      %p68 = por %p66, %p67
      %s70 = sadd.s32 %s69, 1
      %p73 = scmp.eq.s32.totalorder %s21, 1
      %p74 = scmp.ne.s32.totalorder %s69, %s71
      %p75 = scmp.eq.s32.totalorder %s21, 0
      %p76 = por %p74, %p75
      %p77 = scmp.ne.s32.totalorder %s69, %s71
      %p78 = scmp.eq.s32.totalorder %s26, 1
      %p79 = por %p77, %p78
      %p80 = scmp.ne.s32.totalorder %s71, %s72
      %p81 = scmp.eq.s32.totalorder %s26, 0
      %p82 = por %p80, %p81
      %p83 = scmp.ne.s32.totalorder %s71, %s72
      %p84 = scmp.eq.s32.totalorder %s27, 1
      %p85 = por %p83, %p84
      %p87 = scmp.ne.s32.totalorder %s72, %s86
      %p88 = scmp.eq.s32.totalorder %s27, 0
      %p89 = por %p87, %p88
      %s91 = sadd.s32 %s90, 1
      %p94 = scmp.eq.s32.totalorder %s21, 1
      %p95 = scmp.ne.s32.totalorder %s90, %s92
      %p96 = scmp.eq.s32.totalorder %s21, 0
      %p97 = por %p95, %p96
      %p98 = scmp.ne.s32.totalorder %s90, %s92
      %p99 = scmp.eq.s32.totalorder %s26, 1
      %p100 = por %p98, %p99
      %p101 = scmp.ne.s32.totalorder %s92, %s93
      %p102 = scmp.eq.s32.totalorder %s26, 0
      %p103 = por %p101, %p102
      %p104 = scmp.ne.s32.totalorder %s92, %s93
      %p105 = scmp.eq.s32.totalorder %s27, 1
      %p106 = por %p104, %p105
      %p108 = scmp.ne.s32.totalorder %s93, %s107
      %p109 = scmp.eq.s32.totalorder %s27, 0
      %p110 = por %p108, %p109
      %s111 = ssub.s32 %s28, %s40
      %s112 = ssub.s32 %s29, %s36
      %s113 = sor.u32 %s111, %s112
      %p114 = scmp.eq.s32.totalorder %s113, 0
      %s116 = sadd.s32 %s115, 1
      %s117 = scalar_select %p114, %s115, %s116
      %p120 = pneg %p114
      %p121 = scmp.eq.s32.totalorder %s21, 1
      %p122 = por %p120, %p121
      %p123 = scmp.ne.s32.totalorder %s115, %s118
      %p124 = scmp.eq.s32.totalorder %s21, 0
      %p125 = por %p123, %p124
      %p126 = scmp.ne.s32.totalorder %s115, %s118
      %p127 = scmp.eq.s32.totalorder %s26, 1
      %p128 = por %p126, %p127
      %p129 = scmp.ne.s32.totalorder %s118, %s119
      %p130 = scmp.eq.s32.totalorder %s26, 0
      %p131 = por %p129, %p130
      %p132 = scmp.ne.s32.totalorder %s118, %s119
      %p133 = scmp.eq.s32.totalorder %s27, 1
      %p134 = por %p132, %p133
      %p136 = scmp.ne.s32.totalorder %s119, %s135
      %p137 = scmp.eq.s32.totalorder %s27, 0
      %p138 = por %p136, %p137
      %s139 = ssub.s32 %s28, %s40
      %s140 = ssub.s32 %s29, %s36
      %s141 = sor.u32 %s139, %s140
      %p142 = scmp.eq.s32.totalorder %s141, 0
      %s144 = sadd.s32 %s143, 1
      %s145 = scalar_select %p142, %s143, %s144
      %p148 = pneg %p142
      %p149 = scmp.eq.s32.totalorder %s21, 1
      %p150 = por %p148, %p149
      %p151 = scmp.ne.s32.totalorder %s143, %s146
      %p152 = scmp.eq.s32.totalorder %s21, 0
      %p153 = por %p151, %p152
      %p154 = scmp.ne.s32.totalorder %s143, %s146
      %p155 = scmp.eq.s32.totalorder %s26, 1
      %p156 = por %p154, %p155
      %p157 = scmp.ne.s32.totalorder %s146, %s147
      %p158 = scmp.eq.s32.totalorder %s26, 0
      %p159 = por %p157, %p158
      %p160 = scmp.ne.s32.totalorder %s146, %s147
      %p161 = scmp.eq.s32.totalorder %s27, 1
      %p162 = por %p160, %p161
      %p164 = scmp.ne.s32.totalorder %s147, %s163
      %p165 = scmp.eq.s32.totalorder %s27, 0
      %p166 = por %p164, %p165
      %p167 = scmp.le.s32.totalorder 1, %s21
      %p168 = scmp.lt.s32.totalorder %s21, 3
      %p169 = pnand %p167, %p168
      %p170 = pneg %p169
      // Predicated region
      $region9: #{tpu_custom_call.1} parent=5 // pred_check
        _
      $region10: #{tpu_custom_call.1} parent=5 // pred_check_branch
        %172 = sbr.rel (%p169) target = $region12
      $region11: #{tpu_custom_call.1} parent=5 // pred_region
        %s173 = ssub.s32 %s21, 1
        // Predicated region
        $region13: #{tpu_custom_call.1} parent=11 // pred_check
          %p174 = pneg %p82
        $region14: #{tpu_custom_call.1} parent=11 // pred_check_branch
          %176 = sbr.rel (%p174) target = $region16
        $region15: #{tpu_custom_call.1} parent=11 // pred_region
          %s178 = ssub.s32 256, 256
          %179 = vsyncadd [#allocation6], %s178
          %s180 = sshll.u32 [#allocation5], 4
          %s181 = int_to_ptr.vmem [resolvable:$true] %s180
          %186 = dma.hbm_to_vmem [thread:$0]  %s1, 256, %s181, [#allocation6], 64, 64, 4
        $region16: #{tpu_custom_call.1} parent=11 // pred_fallthru
          _
        // Predicated region
        $region17: #{tpu_custom_call.1} parent=11 // pred_check
          %p187 = pneg %p103
        $region18: #{tpu_custom_call.1} parent=11 // pred_check_branch
          %189 = sbr.rel (%p187) target = $region20
        $region19: #{tpu_custom_call.1} parent=11 // pred_region
          %s191 = ssub.s32 256, 256
          %192 = vsyncadd [#allocation6], %s191
          %s193 = sshll.u32 [#allocation7], 4
          %s194 = int_to_ptr.vmem [resolvable:$true] %s193
          %199 = dma.hbm_to_vmem [thread:$0]  %s2, 256, %s194, [#allocation6], 64, 64, 4
        $region20: #{tpu_custom_call.1} parent=11 // pred_fallthru
          _
      $region12: #{tpu_custom_call.1} parent=5 // pred_fallthru
        _
      %p200 = scmp.lt.s32.totalorder %s21, 2
      // Predicated region
      $region21: #{tpu_custom_call.1} parent=5 // pred_check
        %p201 = pneg %p200
      $region22: #{tpu_custom_call.1} parent=5 // pred_check_branch
        %203 = sbr.rel (%p201) target = $region24
      $region23: #{tpu_custom_call.1} parent=5 // pred_region
        // Predicated region
        $region25: #{tpu_custom_call.1} parent=23 // pred_check
          %p204 = pneg %p55
        $region26: #{tpu_custom_call.1} parent=23 // pred_check_branch
          %206 = sbr.rel (%p204) target = $region28
        $region27: #{tpu_custom_call.1} parent=23 // pred_region
          %s207 = sand.u32 %s45, 1
          %s208 = scalar_lea.sflag [#allocation3], %s207
          %s209 = sand.u32 %s45, 1
          %s210 = smul.addr %s209, 4
          %s211 = scalar_lea.vmem [#allocation2], %s210
          %s213 = ssub.s32 64, 64
          %214 = vsyncadd %s208, %s213
          %s215 = sadd.s32 %s29, %s28
          %s216 = smul.addr %s215, 64
          %s217 = scalar_lea.hbm %s0, %s216
          %s219 = sshll.u32 %s211, 4
          %s220 = int_to_ptr.vmem [resolvable:$true] %s219
          %222 = dma.hbm_to_vmem [thread:$0]  %s217, 64, %s220, %s208
        $region28: #{tpu_custom_call.1} parent=23 // pred_fallthru
          _
      $region24: #{tpu_custom_call.1} parent=5 // pred_fallthru
        _
      %p223 = scmp.le.s32.totalorder 1, %s21
      %p224 = scmp.lt.s32.totalorder %s21, 3
      %p225 = pnand %p223, %p224
      %p226 = pneg %p225
      // Predicated region
      $region29: #{tpu_custom_call.1} parent=5 // pred_check
        _
      $region30: #{tpu_custom_call.1} parent=5 // pred_check_branch
        %228 = sbr.rel (%p225) target = $region32
      $region31: #{tpu_custom_call.1} parent=5 // pred_region
        %s229 = ssub.s32 %s21, 1
        %s230 = sand.u32 %s48, 1
        %s231 = scalar_lea.sflag [#allocation3], %s230
        %s232 = sand.u32 %s48, 1
        %s233 = smul.addr %s232, 4
        %s234 = scalar_lea.vmem [#allocation2], %s233
        // Predicated region
        $region33: #{tpu_custom_call.1} parent=31 // pred_check
          %p235 = pneg %p61
        $region34: #{tpu_custom_call.1} parent=31 // pred_check_branch
          %237 = sbr.rel (%p235) target = $region36
        $region35: #{tpu_custom_call.1} parent=31 // pred_region
          %238 = dma.done %s231, 64
        $region36: #{tpu_custom_call.1} parent=31 // pred_fallthru
          _
        // Predicated region
        $region37: #{tpu_custom_call.1} parent=31 // pred_check
          %p239 = pneg %p82
        $region38: #{tpu_custom_call.1} parent=31 // pred_check_branch
          %241 = sbr.rel (%p239) target = $region40
        $region39: #{tpu_custom_call.1} parent=31 // pred_region
          %242 = dma.done [#allocation6], 256
        $region40: #{tpu_custom_call.1} parent=31 // pred_fallthru
          _
        // Predicated region
        $region41: #{tpu_custom_call.1} parent=31 // pred_check
          %p243 = pneg %p103
        $region42: #{tpu_custom_call.1} parent=31 // pred_check_branch
          %245 = sbr.rel (%p243) target = $region44
        $region43: #{tpu_custom_call.1} parent=31 // pred_region
          %246 = dma.done [#allocation6], 256
        $region44: #{tpu_custom_call.1} parent=31 // pred_fallthru
          _
        %s247 = sand.u32 %s48, 1
        %s248 = scalar_lea.sflag [#allocation3], %s247
        %s249 = sand.u32 %s48, 1
        %s250 = smul.addr %s249, 4
        %s251 = scalar_lea.vmem [#allocation2], %s250
        %p252 = pneg %p61
        %p253 = pneg %p58
        %p254 = pneg %p82
        %p255 = pneg %p79
        %p256 = pneg %p103
        %p257 = pneg %p100
        %p258 = pneg %p131
        %p259 = pneg %p128
        %s260 = sand.u32 %s118, 1
        %s261 = scalar_lea.sflag [#allocation4], %s260
        %s262 = sand.u32 %s118, 1
        %s263 = smul.addr %s262, 8
        %s264 = scalar_lea.vmem [#allocation8], %s263
        %p265 = pneg %p159
        %p266 = pneg %p156
        %s267 = sand.u32 %s146, 1
        %s268 = scalar_lea.sflag [#allocation10], %s267
        %s269 = sand.u32 %s146, 1
        %s270 = smul.addr %s269, 8
        %s271 = scalar_lea.vmem [#allocation9], %s270
        %v273 = vld [vmem:[%s234] sm:$0xf]
        %v274 = vld [vmem:[#allocation5] sm:$0xf]
        %v275 = vld [vmem:[#allocation5 + $0x4] sm:$0xf]
        %v276 = vld [vmem:[#allocation5 + $0x8] sm:$0xf]
        %v277 = vld [vmem:[#allocation5 + $0xc] sm:$0xf]
        %v282 = vunpack.c.l.b16 %v274
        %v283 = vunpack.c.l.b16 %v275
        %v284 = vunpack.c.l.b16 %v276
        %v285 = vunpack.c.l.b16 %v277
        %v286 = vpack.c.b16 %v283, %v282
        %v287 = vpack.c.b16 %v285, %v284
        %vm290 = vcmask 261120
        %v292 = vsel %vm290, %v273, 0
        %294 = vmatprep.subr.bf16.mxu0 0
        %295 = vmatpush1.bf16.msra.mxu0 %v286
        %296 = vmatprep.subr.bf16.mxu0 0
        %297 = vmatpush1.bf16.msra.mxu0 %v287
        %298 = vmatprep.subr.bf16.mxu0 0
        %299 = vmatpush1.bf16.msra.mxu0 0
        %300 = vmatprep.subr.bf16.mxu0 0
        %301 = vmatpush1.bf16.msra.mxu0 0
        %302 = vmatprep.subr.bf16.mxu0 0
        %303 = vmatpush1.bf16.msra.mxu0 0
        %304 = vmatprep.subr.bf16.mxu0 0
        %305 = vmatpush1.bf16.msra.mxu0 0
        %306 = vmatprep.subr.bf16.mxu0 0
        %307 = vmatpush1.bf16.msra.mxu0 0
        %308 = vmatprep.subr.bf16.mxu0 0
        %309 = vmatpush1.bf16.msra.mxu0 0
        %310 = vmatprep.subr.bf16.mxu0 0
        %311 = vmatpush1.bf16.msra.mxu0 0
        %312 = vmatprep.subr.bf16.mxu0 0
        %313 = vmatpush1.bf16.msra.mxu0 0
        %314 = vmatprep.subr.bf16.mxu0 0
        %315 = vmatpush1.bf16.msra.mxu0 0
        %316 = vmatprep.subr.bf16.mxu0 0
        %317 = vmatpush1.bf16.msra.mxu0 0
        %318 = vmatprep.subr.bf16.mxu0 0
        %319 = vmatpush1.bf16.msra.mxu0 0
        %320 = vmatprep.subr.bf16.mxu0 0
        %321 = vmatpush1.bf16.msra.mxu0 0
        %322 = vmatprep.subr.bf16.mxu0 0
        %323 = vmatpush1.bf16.msra.mxu0 0
        %324 = vmatprep.subr.bf16.mxu0 0
        %325 = vmatpush1.bf16.msra.mxu0 0
        %326 = vmatprep.mubr.bf16.mxu0 0
        %327 = vmatmul.mubr.bf16.gmra.mrb[0].mxu0 %v292
        %v328 = vpop.f32.mrb[0].mxu0
        %v329 = vadd.f32 0.0, %v328
        %v330 = vpop.f32.mrb[0].mxu0
        %v331 = vpop.f32.mrb[0].mxu0
        %v332 = vpop.f32.mrb[0].mxu0
        %333 = vdwg.mxu0
        %v334 = vld [vmem:[#allocation7] sm:$0xf]
        %v335 = vld [vmem:[#allocation7 + $0x4] sm:$0xf]
        %v336 = vld [vmem:[#allocation7 + $0x8] sm:$0xf]
        %v337 = vld [vmem:[#allocation7 + $0xc] sm:$0xf]
        %v342 = vunpack.c.l.b16 %v334
        %v343 = vunpack.c.l.b16 %v335
        %v344 = vunpack.c.l.b16 %v336
        %v345 = vunpack.c.l.b16 %v337
        %v346 = vpack.c.b16 %v343, %v342
        %v347 = vpack.c.b16 %v345, %v344
        %350 = vmatprep.subr.bf16.mxu0 0
        %351 = vmatpush1.bf16.msra.mxu0 %v346
        %352 = vmatprep.subr.bf16.mxu0 0
        %353 = vmatpush1.bf16.msra.mxu0 %v347
        %354 = vmatprep.subr.bf16.mxu0 0
        %355 = vmatpush1.bf16.msra.mxu0 0
        %356 = vmatprep.subr.bf16.mxu0 0
        %357 = vmatpush1.bf16.msra.mxu0 0
        %358 = vmatprep.subr.bf16.mxu0 0
        %359 = vmatpush1.bf16.msra.mxu0 0
        %360 = vmatprep.subr.bf16.mxu0 0
        %361 = vmatpush1.bf16.msra.mxu0 0
        %362 = vmatprep.subr.bf16.mxu0 0
        %363 = vmatpush1.bf16.msra.mxu0 0
        %364 = vmatprep.subr.bf16.mxu0 0
        %365 = vmatpush1.bf16.msra.mxu0 0
        %366 = vmatprep.subr.bf16.mxu0 0
        %367 = vmatpush1.bf16.msra.mxu0 0
        %368 = vmatprep.subr.bf16.mxu0 0
        %369 = vmatpush1.bf16.msra.mxu0 0
        %370 = vmatprep.subr.bf16.mxu0 0
        %371 = vmatpush1.bf16.msra.mxu0 0
        %372 = vmatprep.subr.bf16.mxu0 0
        %373 = vmatpush1.bf16.msra.mxu0 0
        %374 = vmatprep.subr.bf16.mxu0 0
        %375 = vmatpush1.bf16.msra.mxu0 0
        %376 = vmatprep.subr.bf16.mxu0 0
        %377 = vmatpush1.bf16.msra.mxu0 0
        %378 = vmatprep.subr.bf16.mxu0 0
        %379 = vmatpush1.bf16.msra.mxu0 0
        %380 = vmatprep.subr.bf16.mxu0 0
        %381 = vmatpush1.bf16.msra.mxu0 0
        %382 = vmatprep.mubr.bf16.mxu0 0
        %383 = vmatmul.mubr.bf16.gmra.mrb[0].mxu0 %v292
        %v384 = vpop.f32.mrb[0].mxu0
        %v385 = vadd.f32 0.0, %v384
        %v386 = vpop.f32.mrb[0].mxu0
        %v387 = vpop.f32.mrb[0].mxu0
        %v388 = vpop.f32.mrb[0].mxu0
        %389 = vdwg.mxu0
        %v390 = vpack.c.bf16 %v329, %v329
        %vm391 = vcmask 125952
        %392 = vst.msk [vmem:[%s264] sm:$0xf] %vm391, %v390
        %v393 = vpack.c.bf16 %v385, %v385
        %394 = vst.msk [vmem:[%s271] sm:$0xf] %vm391, %v393
        %v396 = vunpack.c.l.b16 %v390
        %v397 = vpack.c.b16 %v396, %v396
        %398 = vrot.lane.b32.xlu0 %v397, 112
        %v399 = vpop.permute.xlu0 %398
        %s401 = scalar_lea.vmem %s264, 4 [#allocation8]
        %402 = vst.msk [vmem:[%s401] sm:$0xf] %vm391, %v399
        %v404 = vunpack.c.l.b16 %v393
        %v405 = vpack.c.b16 %v404, %v404
        %406 = vrot.lane.b32.xlu0 %v405, 112
        %v407 = vpop.permute.xlu0 %406
        %s409 = scalar_lea.vmem %s271, 4 [#allocation9]
        %410 = vst.msk [vmem:[%s409] sm:$0xf] %vm391, %v407
        %s411 = sand.u32 %s118, 1
        %s412 = scalar_lea.sflag [#allocation4], %s411
        %s413 = sand.u32 %s118, 1
        %s414 = smul.addr %s413, 8
        %s415 = scalar_lea.vmem [#allocation8], %s414
        %s416 = sand.u32 %s146, 1
        %s417 = scalar_lea.sflag [#allocation10], %s416
        %s418 = sand.u32 %s146, 1
        %s419 = smul.addr %s418, 8
        %s420 = scalar_lea.vmem [#allocation9], %s419
        // Predicated region
        $region45: #{tpu_custom_call.1} parent=31 // pred_check
          %p421 = pneg %p128
        $region46: #{tpu_custom_call.1} parent=31 // pred_check_branch
          %423 = sbr.rel (%p421) target = $region48
        $region47: #{tpu_custom_call.1} parent=31 // pred_region
          %s425 = ssub.s32 128, 128
          %426 = vsyncadd %s412, %s425
          %s427 = smul.addr %s30, 2
          %s428 = sadd.s32 %s31, %s427
          %s429 = smul.addr %s428, 64
          %s430 = scalar_lea.hbm %s3, %s429
          %s431 = sshll.u32 %s415, 4
          %s432 = int_to_ptr.vmem [resolvable:$true] %s431
          %437 = dma.vmem_to_hbm [thread:$0]  %s432, 128, %s430, %s412, 64, 64, 4
        $region48: #{tpu_custom_call.1} parent=31 // pred_fallthru
          _
        // Predicated region
        $region49: #{tpu_custom_call.1} parent=31 // pred_check
          %p438 = pneg %p156
        $region50: #{tpu_custom_call.1} parent=31 // pred_check_branch
          %440 = sbr.rel (%p438) target = $region52
        $region51: #{tpu_custom_call.1} parent=31 // pred_region
          %s442 = ssub.s32 128, 128
          %443 = vsyncadd %s417, %s442
          %s444 = smul.addr %s30, 2
          %s445 = sadd.s32 %s31, %s444
          %s446 = smul.addr %s445, 64
          %s447 = scalar_lea.hbm %s4, %s446
          %s448 = sshll.u32 %s420, 4
          %s449 = int_to_ptr.vmem [resolvable:$true] %s448
          %454 = dma.vmem_to_hbm [thread:$0]  %s449, 128, %s447, %s417, 64, 64, 4
        $region52: #{tpu_custom_call.1} parent=31 // pred_fallthru
          _
      $region32: #{tpu_custom_call.1} parent=5 // pred_fallthru
        _
      %p455 = scmp.le.s32.totalorder 2, %s21
      // Predicated region
      $region53: #{tpu_custom_call.1} parent=5 // pred_check
        %p456 = pneg %p455
      $region54: #{tpu_custom_call.1} parent=5 // pred_check_branch
        %458 = sbr.rel (%p456) target = $region56
      $region55: #{tpu_custom_call.1} parent=5 // pred_region
        %s459 = ssub.s32 %s21, 2
        // Predicated region
        $region57: #{tpu_custom_call.1} parent=55 // pred_check
          %p460 = pneg %p134
        $region58: #{tpu_custom_call.1} parent=55 // pred_check_branch
          %462 = sbr.rel (%p460) target = $region60
        $region59: #{tpu_custom_call.1} parent=55 // pred_region
          %s463 = sand.u32 %s119, 1
          %s464 = scalar_lea.sflag [#allocation4], %s463
          %s465 = sand.u32 %s119, 1
          %s466 = smul.addr %s465, 8
          %s467 = scalar_lea.vmem [#allocation8], %s466
          %468 = dma.done %s464, 128
        $region60: #{tpu_custom_call.1} parent=55 // pred_fallthru
          _
        // Predicated region
        $region61: #{tpu_custom_call.1} parent=55 // pred_check
          %p469 = pneg %p162
        $region62: #{tpu_custom_call.1} parent=55 // pred_check_branch
          %471 = sbr.rel (%p469) target = $region64
        $region63: #{tpu_custom_call.1} parent=55 // pred_region
          %s472 = sand.u32 %s147, 1
          %s473 = scalar_lea.sflag [#allocation10], %s472
          %s474 = sand.u32 %s147, 1
          %s475 = smul.addr %s474, 8
          %s476 = scalar_lea.vmem [#allocation9], %s475
          %477 = dma.done %s473, 128
        $region64: #{tpu_custom_call.1} parent=55 // pred_fallthru
          _
      $region56: #{tpu_custom_call.1} parent=5 // pred_fallthru
        _
    $region6: #{tpu_custom_call.1} parent=1 // loop_footer
      %s25 = sadd.s32 1, %s21
    $region7: #{tpu_custom_call.1} parent=1 // loop_footer_branch
      %20 = sbr.rel target = $region3
    $region8: #{tpu_custom_call.1} parent=1 // loop_exit
      _
    %478 = vsyncpa [#allocation3], 1
    %s479 = scalar_lea.sflag [#allocation3], 1
    %480 = vsyncpa %s479, 1
    %481 = vsyncpa [#allocation6], 1
    %482 = vsyncpa [#allocation4], 1
    %s483 = scalar_lea.sflag [#allocation4], 1
    %484 = vsyncpa %s483, 1
    %485 = vsyncpa [#allocation10], 1
    %s486 = scalar_lea.sflag [#allocation10], 1
    %487 = vsyncpa %s486, 1

</llo_original>
